<compile_context>
chip_gen: v7x
topology: tpu7x:2x2x1
jax: 0.10.0
libtpu: 0.0.40
codegen_flags: <defaults>
</compile_context>

<pallas_src>
import functools

import jax
import jax.numpy as jnp
from jax.experimental import pallas as pl
from jax.experimental.pallas import tpu as pltpu


def decoder_kernel(z_ref, w1_ref, b1_ref, w2_ref, b2_ref, w3_ref, b3_ref, o_ref):
    """Fused packed 3-layer MLP for one batch tile.

    z_ref holds P samples per row (lane-dense packing); w*_refs are P-way block-diagonal
    copies of the original weights, so one `row @ W` evaluates the layer for all P samples.
    Matmuls run in the weights' dtype (f32 or bf16) with f32 MXU accumulation; bias add and
    ReLU stay in f32 (v5e-safe).
    """
    mm_dtype = w1_ref.dtype
    z = z_ref[...].astype(mm_dtype)  # in-kernel cast (identity for f32); hidden under DMA

    h1 = jnp.dot(z, w1_ref[...], preferred_element_type=jnp.float32)
    h1 = jnp.maximum(h1 + b1_ref[...], 0.0)

    h2 = jnp.dot(h1.astype(mm_dtype), w2_ref[...], preferred_element_type=jnp.float32)
    h2 = jnp.maximum(h2 + b2_ref[...], 0.0)

    out = jnp.dot(h2.astype(mm_dtype), w3_ref[...], preferred_element_type=jnp.float32)
    o_ref[...] = (out + b3_ref[...]).astype(o_ref.dtype)


def _pack_factor(batch_size, out_dim):
    """Samples packed per kernel row.

    Chosen so out_dim * P is lane-dense (128 where possible) and P divides the batch,
    so the z / output reshapes are free row-major views (no pad, no copy)."""
    if out_dim >= 128:
        target = 1
    elif 128 % out_dim == 0:
        target = min(16, 128 // out_dim)
    else:
        target = 8
    p = target
    while p > 1 and batch_size % p != 0:
        p //= 2
    return max(p, 1)


@functools.partial(jax.jit, static_argnames=("block_rows", "compute_dtype", "out_dtype"))
def decoder_forward(z, params, *, block_rows=1024, compute_dtype=jnp.float32,
                    out_dtype=jnp.float32):
    w1, b1, w2, b2, w3, b3 = params
    B, latent_dim = z.shape
    h1_dim, h2_dim, out_dim = w1.shape[1], w2.shape[1], w3.shape[1]

    # ---- sample packing: P samples per packed row -> lane-dense blocks -------------------
    P = _pack_factor(B, out_dim)
    Bp = B // P                                   # P divides B by construction
    Lp, H1p, H2p, Op = latent_dim * P, h1_dim * P, h2_dim * P, out_dim * P

    zp = z.reshape(Bp, Lp)                        # free row-major view; stays f32 into the kernel

    def pack_w(w):                                # P-way block-diagonal copy, in compute_dtype
        w = w.astype(compute_dtype)
        return jnp.kron(jnp.eye(P, dtype=w.dtype), w) if P > 1 else w

    def pack_b(b):                                # biases stay f32 (elementwise math in f32)
        b = b.astype(jnp.float32)
        return jnp.tile(b, (1, P)) if P > 1 else b

    w1p, w2p, w3p = pack_w(w1), pack_w(w2), pack_w(w3)
    b1p, b2p, b3p = pack_b(b1), pack_b(b2), pack_b(b3)

    # ---- tile selection -------------------------------------------------------------------
    sub = 16 if (compute_dtype == jnp.bfloat16 or out_dtype == jnp.bfloat16) else 8
    if Bp >= 2 * sub:
        tbp = min(block_rows, pl.cdiv(Bp, 2))     # >=2 grid steps so both v7x TCs get work
        tbp = max(sub, (tbp // sub) * sub)        # sublane-aligned tile
    else:
        tbp = Bp                                  # tiny batch: single full-array block (always legal)
    n_blocks = pl.cdiv(Bp, tbp)                   # last block may be partial; Pallas masks it

    # ---- VMEM budget (lane-dense I/O blocks, resident weights, f32 activations) ------------
    item = jnp.dtype(compute_dtype).itemsize
    weights_vmem = 2 * item * (w1p.size + w2p.size + w3p.size) \
        + 2 * 4 * (b1p.size + b2p.size + b3p.size)
    io_vmem = 2 * 4 * tbp * (Lp + Op)             # double-buffered z / out blocks (f32)
    act_vmem = tbp * (H1p + H2p) * (4 + item)     # f32 activations + cast copies
    vmem_limit = int(min(max(1.5 * (weights_vmem + io_vmem + act_vmem) + (4 << 20), 32 << 20),
                         56 << 20))               # <= 56 MiB: fits v7x's 64 MiB physical VMEM

    cost = pl.CostEstimate(
        flops=2 * B * (latent_dim * h1_dim + h1_dim * h2_dim + h2_dim * out_dim),
        bytes_accessed=B * latent_dim * 4
        + B * out_dim * jnp.dtype(out_dtype).itemsize
        + item * (w1p.size + w2p.size + w3p.size)
        + 4 * (b1p.size + b2p.size + b3p.size),
        transcendentals=0,
    )

    def resident(arr):
        # Full-array block, same block index every grid step -> DMA'd once, stays VMEM-resident.
        return pl.BlockSpec(arr.shape, lambda i: (0, 0))

    out = pl.pallas_call(
        decoder_kernel,
        out_shape=jax.ShapeDtypeStruct((Bp, Op), out_dtype),
        grid_spec=pltpu.PrefetchScalarGridSpec(
            num_scalar_prefetch=0,
            grid=(n_blocks,),
            in_specs=[
                pl.BlockSpec((tbp, Lp), lambda i: (i, 0)),   # packed z: pipelined batch tiles
                resident(w1p), resident(b1p),
                resident(w2p), resident(b2p),
                resident(w3p), resident(b3p),
            ],
            out_specs=pl.BlockSpec((tbp, Op), lambda i: (i, 0)),
        ),
        compiler_params=pltpu.CompilerParams(
            dimension_semantics=("parallel",),    # v7x: shard batch tiles across both TCs
            vmem_limit_bytes=vmem_limit,
        ),
        cost_estimate=cost,
    )(zp, w1p, b1p, w2p, b2p, w3p, b3p)

    return out.reshape(B, out_dim)                # free unpack; no slicing (P divides B)


def init_params(key, latent_dim, output_dim):
    # Deterministic init mimicking nn.Linear default (uniform in +-1/sqrt(fan_in)).
    def linear(k, fan_in, fan_out):
        kw, kb = jax.random.split(k)
        bound = 1.0 / jnp.sqrt(fan_in)
        w = jax.random.uniform(kw, (fan_in, fan_out), jnp.float32, -bound, bound)
        b = jax.random.uniform(kb, (1, fan_out), jnp.float32, -bound, bound)
        return w, b

    k1, k2, k3 = jax.random.split(key, 3)
    w1, b1 = linear(k1, latent_dim, 32)
    w2, b2 = linear(k2, 32, 64)
    w3, b3 = linear(k3, 64, output_dim)
    return (w1, b1, w2, b2, w3, b3)


def reference_forward(z, params):
    w1, b1, w2, b2, w3, b3 = params
    h1 = jnp.maximum(z @ w1 + b1, 0.0)
    h2 = jnp.maximum(h1 @ w2 + b2, 0.0)
    return h2 @ w3 + b3


if __name__ == "__main__":
    latent_dim, output_dim = 16, 8
    key = jax.random.PRNGKey(0)
    kz, kp, kz2, kz3 = jax.random.split(key, 4)
    params = init_params(kp, latent_dim, output_dim)

    # Small batch (P=8, single grid step), exact f32 path.
    z_small = jax.random.normal(kz, (8, latent_dim), jnp.float32)
    out_small = jax.block_until_ready(decoder_forward(z_small, params))
    ref_small = reference_forward(z_small, params)
    assert out_small.shape == (8, output_dim)
    assert jnp.allclose(out_small, ref_small, atol=1e-5, rtol=1e-5), "f32 small-batch mismatch"

    # Ragged batch (B=1000 -> P=8, 3 grid steps, partial last block; no wrapper pad/copy).
    z_big = jax.random.normal(kz2, (1000, latent_dim), jnp.float32)
    out_big = jax.block_until_ready(decoder_forward(z_big, params))
    ref_big = reference_forward(z_big, params)
    assert out_big.shape == (1000, output_dim)
    assert jnp.allclose(out_big, ref_big, atol=1e-5, rtol=1e-5), "f32 gridded mismatch"

    # Lane-dense packed path (B=4096 -> P=16, 128-wide output blocks, 2 grid steps).
    z_dense = jax.random.normal(kz3, (4096, latent_dim), jnp.float32)
    out_dense = jax.block_until_ready(decoder_forward(z_dense, params))
    ref_dense = reference_forward(z_dense, params)
    assert out_dense.shape == (4096, output_dim)
    assert jnp.allclose(out_dense, ref_dense, atol=1e-5, rtol=1e-5), "f32 packed mismatch"

    # Optional bf16-operand path (f32 accumulation, in-kernel cast of z).
    out_bf16 = jax.block_until_ready(
        decoder_forward(z_dense, params, compute_dtype=jnp.bfloat16))
    assert out_bf16.shape == (4096, output_dim)
    assert jnp.allclose(out_bf16, ref_dense, atol=1e-1, rtol=1e-1), "bf16 path diverged"

    print("KERNEL_OK")
</pallas_src>

<mosaic_0001>
module attributes {stable_mosaic.version = 11 : i64} {
  func.func @decoder_kernel(%arg0: i32, %arg1: memref<1x128xf32, #tpu.memory_space<vmem>>, %arg2: memref<128x256xf32, #tpu.memory_space<vmem>>, %arg3: memref<1x256xf32, #tpu.memory_space<vmem>>, %arg4: memref<256x512xf32, #tpu.memory_space<vmem>>, %arg5: memref<1x512xf32, #tpu.memory_space<vmem>>, %arg6: memref<512x64xf32, #tpu.memory_space<vmem>>, %arg7: memref<1x64xf32, #tpu.memory_space<vmem>>, %arg8: memref<1x64xf32, #tpu.memory_space<vmem>>) attributes {dimension_semantics = [#tpu.dimension_semantics<parallel>], iteration_bounds = array<i64: 1>, scalar_prefetch = 0 : i64, scratch_operands = 0 : i64, tpu.core_type = #tpu.core_type<tc>, window_params = [{transform_indices = @transform_0, window_bounds = array<i64: 1, 128>}, {pipeline_mode = #tpu.pipeline_mode<synchronous>, transform_indices = @transform_1, window_bounds = array<i64: 128, 256>}, {pipeline_mode = #tpu.pipeline_mode<synchronous>, transform_indices = @transform_2, window_bounds = array<i64: 1, 256>}, {pipeline_mode = #tpu.pipeline_mode<synchronous>, transform_indices = @transform_3, window_bounds = array<i64: 256, 512>}, {pipeline_mode = #tpu.pipeline_mode<synchronous>, transform_indices = @transform_4, window_bounds = array<i64: 1, 512>}, {pipeline_mode = #tpu.pipeline_mode<synchronous>, transform_indices = @transform_5, window_bounds = array<i64: 512, 64>}, {pipeline_mode = #tpu.pipeline_mode<synchronous>, transform_indices = @transform_6, window_bounds = array<i64: 1, 64>}, {transform_indices = @transform_7, window_bounds = array<i64: 1, 64>}]} {
    %c0 = arith.constant 0 : index
    %c0_0 = arith.constant 0 : index
    %0 = vector.load %arg1[%c0, %c0_0] : memref<1x128xf32, #tpu.memory_space<vmem>>, vector<1x128xf32>
    %c0_1 = arith.constant 0 : index
    %c0_2 = arith.constant 0 : index
    %1 = vector.load %arg2[%c0_1, %c0_2] : memref<128x256xf32, #tpu.memory_space<vmem>>, vector<128x256xf32>
    %cst = arith.constant dense<0.000000e+00> : vector<1x256xf32>
    %2 = tpu.matmul %0, %1, %cst {dimension_numbers = #tpu.dot_dimension_numbers<[1], [0], [0], [1], [0, 0, 1, 1], [], []>} : vector<1x128xf32>, vector<128x256xf32>, vector<1x256xf32> -> vector<1x256xf32>
    %c0_3 = arith.constant 0 : index
    %c0_4 = arith.constant 0 : index
    %3 = vector.load %arg3[%c0_3, %c0_4] : memref<1x256xf32, #tpu.memory_space<vmem>>, vector<1x256xf32>
    %4 = arith.addf %2, %3 : vector<1x256xf32>
    %cst_5 = arith.constant 0.000000e+00 : f32
    %5 = vector.broadcast %cst_5 : f32 to vector<1x256xf32>
    %6 = arith.maximumf %4, %5 : vector<1x256xf32>
    %c0_6 = arith.constant 0 : index
    %c0_7 = arith.constant 0 : index
    %7 = vector.load %arg4[%c0_6, %c0_7] : memref<256x512xf32, #tpu.memory_space<vmem>>, vector<256x512xf32>
    %cst_8 = arith.constant dense<0.000000e+00> : vector<1x512xf32>
    %8 = tpu.matmul %6, %7, %cst_8 {dimension_numbers = #tpu.dot_dimension_numbers<[1], [0], [0], [1], [0, 0, 1, 1], [], []>} : vector<1x256xf32>, vector<256x512xf32>, vector<1x512xf32> -> vector<1x512xf32>
    %c0_9 = arith.constant 0 : index
    %c0_10 = arith.constant 0 : index
    %9 = vector.load %arg5[%c0_9, %c0_10] : memref<1x512xf32, #tpu.memory_space<vmem>>, vector<1x512xf32>
    %10 = arith.addf %8, %9 : vector<1x512xf32>
    %cst_11 = arith.constant 0.000000e+00 : f32
    %11 = vector.broadcast %cst_11 : f32 to vector<1x512xf32>
    %12 = arith.maximumf %10, %11 : vector<1x512xf32>
    %c0_12 = arith.constant 0 : index
    %c0_13 = arith.constant 0 : index
    %13 = vector.load %arg6[%c0_12, %c0_13] : memref<512x64xf32, #tpu.memory_space<vmem>>, vector<512x64xf32>
    %cst_14 = arith.constant dense<0.000000e+00> : vector<1x64xf32>
    %14 = tpu.matmul %12, %13, %cst_14 {dimension_numbers = #tpu.dot_dimension_numbers<[1], [0], [0], [1], [0, 0, 1, 1], [], []>} : vector<1x512xf32>, vector<512x64xf32>, vector<1x64xf32> -> vector<1x64xf32>
    %c0_15 = arith.constant 0 : index
    %c0_16 = arith.constant 0 : index
    %15 = vector.load %arg7[%c0_15, %c0_16] : memref<1x64xf32, #tpu.memory_space<vmem>>, vector<1x64xf32>
    %16 = arith.addf %14, %15 : vector<1x64xf32>
    %c0_17 = arith.constant 0 : index
    %c0_18 = arith.constant 0 : index
    %17 = vector.load %arg8[%c0_17, %c0_18] : memref<1x64xf32, #tpu.memory_space<vmem>>, vector<1x64xf32>
    tpu.vector_store %arg8[%c0_17, %c0_18], %16 {strides = array<i32>} : memref<1x64xf32, #tpu.memory_space<vmem>>, vector<1x64xf32>,
    return
  }
  func.func @transform_0(%arg0: i32) -> (i32, i32) {
    %c0_i32 = arith.constant 0 : i32
    %c0_i32_0 = arith.constant 0 : i32
    return %arg0, %c0_i32 : i32, i32
  }
  func.func @transform_1(%arg0: i32) -> (i32, i32) {
    %c0_i32 = arith.constant 0 : i32
    %c0_i32_0 = arith.constant 0 : i32
    %c0_i32_1 = arith.constant 0 : i32
    return %c0_i32, %c0_i32_0 : i32, i32
  }
  func.func @transform_2(%arg0: i32) -> (i32, i32) {
    %c0_i32 = arith.constant 0 : i32
    %c0_i32_0 = arith.constant 0 : i32
    %c0_i32_1 = arith.constant 0 : i32
    return %c0_i32, %c0_i32_0 : i32, i32
  }
  func.func @transform_3(%arg0: i32) -> (i32, i32) {
    %c0_i32 = arith.constant 0 : i32
    %c0_i32_0 = arith.constant 0 : i32
    %c0_i32_1 = arith.constant 0 : i32
    return %c0_i32, %c0_i32_0 : i32, i32
  }
  func.func @transform_4(%arg0: i32) -> (i32, i32) {
    %c0_i32 = arith.constant 0 : i32
    %c0_i32_0 = arith.constant 0 : i32
    %c0_i32_1 = arith.constant 0 : i32
    return %c0_i32, %c0_i32_0 : i32, i32
  }
  func.func @transform_5(%arg0: i32) -> (i32, i32) {
    %c0_i32 = arith.constant 0 : i32
    %c0_i32_0 = arith.constant 0 : i32
    %c0_i32_1 = arith.constant 0 : i32
    return %c0_i32, %c0_i32_0 : i32, i32
  }
  func.func @transform_6(%arg0: i32) -> (i32, i32) {
    %c0_i32 = arith.constant 0 : i32
    %c0_i32_0 = arith.constant 0 : i32
    %c0_i32_1 = arith.constant 0 : i32
    return %c0_i32, %c0_i32_0 : i32, i32
  }
  func.func @transform_7(%arg0: i32) -> (i32, i32) {
    %c0_i32 = arith.constant 0 : i32
    %c0_i32_0 = arith.constant 0 : i32
    return %arg0, %c0_i32 : i32, i32
  }
}

</mosaic_0001>

<llo_original>
// kernel: decoder_forward.1
$region0: #{decoder_forward.1}
  #allocation0 [shape = 'u32[]', space=smem, size = 0x4, offset = 0x4, fixed_abs, tag = 'smem constant byte address 0x4 - core index']
  #allocation1 [shape = 'u32[144,128]{1,0:T(1,128)}', space=vmem, size = 0x12000, scoped, tag = 'internal scratch']
  %s0 = inlined_call_operand.vmem [shape: f32[1,128], index: 0, kind: input, shape index: {}]
  %s1 = inlined_call_operand.vmem [shape: f32[128,256], index: 1, kind: input, shape index: {}]
  %s2 = inlined_call_operand.vmem [shape: f32[1,256], index: 2, kind: input, shape index: {}]
  %s3 = inlined_call_operand.vmem [shape: f32[256,512], index: 3, kind: input, shape index: {}]
  %s4 = inlined_call_operand.vmem [shape: f32[1,512], index: 4, kind: input, shape index: {}]
  %s5 = inlined_call_operand.vmem [shape: f32[512,64], index: 5, kind: input, shape index: {}]
  %s6 = inlined_call_operand.vmem [shape: f32[1,64], index: 6, kind: input, shape index: {}]
  %s7 = inlined_call_operand.vmem [shape: f32[1,64], index: 7, kind: output, shape index: {}]
  %s8 = sld [smem:[#allocation0]]
  $region38: #{decoder_forward.1} parent=0
    _
  %s10 = ssub.s32 1, %s8
  %s11 = scalar_select 0, %s10, %s8
  // Predicated region
  $region2: #{decoder_forward.1} parent=0 // pred_check
    _
  $region3: #{decoder_forward.1} parent=0 // pred_check_branch
    %13 = sbr.rel (0) target = $region5
  $region4: #{decoder_forward.1} parent=0 // pred_region
    _
  $region5: #{decoder_forward.1} parent=0 // pred_fallthru
    _
  // Predicated region
  $region6: #{decoder_forward.1} parent=0 // pred_check
    _
  $region7: #{decoder_forward.1} parent=0 // pred_check_branch
    %15 = sbr.rel (0) target = $region9
  $region8: #{decoder_forward.1} parent=0 // pred_region
    _
  $region9: #{decoder_forward.1} parent=0 // pred_fallthru
    _
  // Predicated region
  $region10: #{decoder_forward.1} parent=0 // pred_check
    _
  $region11: #{decoder_forward.1} parent=0 // pred_check_branch
    %17 = sbr.rel (0) target = $region13
  $region12: #{decoder_forward.1} parent=0 // pred_region
    _
  $region13: #{decoder_forward.1} parent=0 // pred_fallthru
    _
  // Predicated region
  $region14: #{decoder_forward.1} parent=0 // pred_check
    _
  $region15: #{decoder_forward.1} parent=0 // pred_check_branch
    %19 = sbr.rel (0) target = $region17
  $region16: #{decoder_forward.1} parent=0 // pred_region
    _
  $region17: #{decoder_forward.1} parent=0 // pred_fallthru
    _
  // Predicated region
  $region18: #{decoder_forward.1} parent=0 // pred_check
    _
  $region19: #{decoder_forward.1} parent=0 // pred_check_branch
    %21 = sbr.rel (0) target = $region21
  $region20: #{decoder_forward.1} parent=0 // pred_region
    _
  $region21: #{decoder_forward.1} parent=0 // pred_fallthru
    _
  // Predicated region
  $region22: #{decoder_forward.1} parent=0 // pred_check
    _
  $region23: #{decoder_forward.1} parent=0 // pred_check_branch
    %23 = sbr.rel (0) target = $region25
  $region24: #{decoder_forward.1} parent=0 // pred_region
    _
  $region25: #{decoder_forward.1} parent=0 // pred_fallthru
    _
  // Predicated region
  $region26: #{decoder_forward.1} parent=0 // pred_check
    _
  $region27: #{decoder_forward.1} parent=0 // pred_check_branch
    %25 = sbr.rel (0) target = $region29
  $region28: #{decoder_forward.1} parent=0 // pred_region
    _
  $region29: #{decoder_forward.1} parent=0 // pred_fallthru
    _
  %v26 = vld [vmem:[%s0] sm:$0x1]
  %v27 = vld [vmem:[%s1] sm:$0xff]
  %v28 = vld [vmem:[%s1 + $0x8] sm:$0xff]
  %v29 = vld [vmem:[%s1 + $0x10] sm:$0xff]
  %v30 = vld [vmem:[%s1 + $0x18] sm:$0xff]
  %v31 = vld [vmem:[%s1 + $0x20] sm:$0xff]
  %v32 = vld [vmem:[%s1 + $0x28] sm:$0xff]
  %v33 = vld [vmem:[%s1 + $0x30] sm:$0xff]
  %v34 = vld [vmem:[%s1 + $0x38] sm:$0xff]
  %v35 = vld [vmem:[%s1 + $0x40] sm:$0xff]
  %v36 = vld [vmem:[%s1 + $0x48] sm:$0xff]
  %v37 = vld [vmem:[%s1 + $0x50] sm:$0xff]
  %v38 = vld [vmem:[%s1 + $0x58] sm:$0xff]
  %v39 = vld [vmem:[%s1 + $0x60] sm:$0xff]
  %v40 = vld [vmem:[%s1 + $0x68] sm:$0xff]
  %v41 = vld [vmem:[%s1 + $0x70] sm:$0xff]
  %v42 = vld [vmem:[%s1 + $0x78] sm:$0xff]
  %v43 = vld [vmem:[%s1 + $0x80] sm:$0xff]
  %v44 = vld [vmem:[%s1 + $0x88] sm:$0xff]
  %v45 = vld [vmem:[%s1 + $0x90] sm:$0xff]
  %v46 = vld [vmem:[%s1 + $0x98] sm:$0xff]
  %v47 = vld [vmem:[%s1 + $0xa0] sm:$0xff]
  %v48 = vld [vmem:[%s1 + $0xa8] sm:$0xff]
  %v49 = vld [vmem:[%s1 + $0xb0] sm:$0xff]
  %v50 = vld [vmem:[%s1 + $0xb8] sm:$0xff]
  %v51 = vld [vmem:[%s1 + $0xc0] sm:$0xff]
  %v52 = vld [vmem:[%s1 + $0xc8] sm:$0xff]
  %v53 = vld [vmem:[%s1 + $0xd0] sm:$0xff]
  %v54 = vld [vmem:[%s1 + $0xd8] sm:$0xff]
  %v55 = vld [vmem:[%s1 + $0xe0] sm:$0xff]
  %v56 = vld [vmem:[%s1 + $0xe8] sm:$0xff]
  %v57 = vld [vmem:[%s1 + $0xf0] sm:$0xff]
  %v58 = vld [vmem:[%s1 + $0xf8] sm:$0xff]
  %v59 = vld [vmem:[%s2] sm:$0x3]
  %v61 = vlaneseq
  %v62 = vshrl.u32 %v61, 7
  %v63 = vsub.s32 0, %v62
  %v64 = vrot.slane %v59, %v63
  %v65 = vlaneseq
  %v66 = vshrl.u32 %v65, 7
  %v67 = vsub.s32 1, %v66
  %v68 = vrot.slane %v59, %v67
  %71 = vmatprep.subr.mxu0 %v28
  %72 = vmatpush1.msra.mxu0 %v27
  %73 = vmatprep.subr.mxu0 %v30
  %74 = vmatpush1.msra.mxu0 %v29
  %75 = vmatprep.subr.mxu0 %v32
  %76 = vmatpush1.msra.mxu0 %v31
  %77 = vmatprep.subr.mxu0 %v34
  %78 = vmatpush1.msra.mxu0 %v33
  %79 = vmatprep.subr.mxu0 %v36
  %80 = vmatpush1.msra.mxu0 %v35
  %81 = vmatprep.subr.mxu0 %v38
  %82 = vmatpush1.msra.mxu0 %v37
  %83 = vmatprep.subr.mxu0 %v40
  %84 = vmatpush1.msra.mxu0 %v39
  %85 = vmatprep.subr.mxu0 %v42
  %86 = vmatpush1.msra.mxu0 %v41
  %87 = vmatprep.subr.mxu0 %v44
  %88 = vmatpush1.msra.mxu0 %v43
  %89 = vmatprep.subr.mxu0 %v46
  %90 = vmatpush1.msra.mxu0 %v45
  %91 = vmatprep.subr.mxu0 %v48
  %92 = vmatpush1.msra.mxu0 %v47
  %93 = vmatprep.subr.mxu0 %v50
  %94 = vmatpush1.msra.mxu0 %v49
  %95 = vmatprep.subr.mxu0 %v52
  %96 = vmatpush1.msra.mxu0 %v51
  %97 = vmatprep.subr.mxu0 %v54
  %98 = vmatpush1.msra.mxu0 %v53
  %99 = vmatprep.subr.mxu0 %v56
  %100 = vmatpush1.msra.mxu0 %v55
  %101 = vmatprep.subr.mxu0 %v58
  %102 = vmatpush1.msra.mxu0 %v57
  %103 = vmatprep.subr.mxu0 0.0
  %104 = vmatpush1.msra.mxu0 0.0
  %105 = vmatprep.subr.mxu0 0.0
  %106 = vmatpush1.msra.mxu0 0.0
  %107 = vmatprep.subr.mxu0 0.0
  %108 = vmatpush1.msra.mxu0 0.0
  %109 = vmatprep.subr.mxu0 0.0
  %110 = vmatpush1.msra.mxu0 0.0
  %111 = vmatprep.subr.mxu0 0.0
  %112 = vmatpush1.msra.mxu0 0.0
  %113 = vmatprep.subr.mxu0 0.0
  %114 = vmatpush1.msra.mxu0 0.0
  %115 = vmatprep.subr.mxu0 0.0
  %116 = vmatpush1.msra.mxu0 0.0
  %117 = vmatprep.subr.mxu0 0.0
  %118 = vmatpush1.msra.mxu0 0.0
  %119 = vmatprep.subr.mxu0 0.0
  %120 = vmatpush1.msra.mxu0 0.0
  %121 = vmatprep.subr.mxu0 0.0
  %122 = vmatpush1.msra.mxu0 0.0
  %123 = vmatprep.subr.mxu0 0.0
  %124 = vmatpush1.msra.mxu0 0.0
  %125 = vmatprep.subr.mxu0 0.0
  %126 = vmatpush1.msra.mxu0 0.0
  %127 = vmatprep.subr.mxu0 0.0
  %128 = vmatpush1.msra.mxu0 0.0
  %129 = vmatprep.subr.mxu0 0.0
  %130 = vmatpush1.msra.mxu0 0.0
  %131 = vmatprep.subr.mxu0 0.0
  %132 = vmatpush1.msra.mxu0 0.0
  %133 = vmatprep.subr.mxu0 0.0
  %134 = vmatpush1.msra.mxu0 0.0
  %135 = vmatprep.mubr.f32.mxu0 0.0
  %136 = vmatmul.mubr.f32.gmra.mrb[0].mxu0 %v26
  %v137 = vpop.f32.mrb[0].mxu0
  %v138 = vadd.f32 %v64, %v137
  %v139 = vpop.f32.mrb[0].mxu0
  %v140 = vadd.f32 %v68, %v139
  %141 = vdwg.mxu0
  %v142 = vmax.f32 %v138, 0.0
  %v143 = vmax.f32 %v140, 0.0
  %v144 = vld [vmem:[%s3] sm:$0xff]
  %v145 = vld [vmem:[%s3 + $0x8] sm:$0xff]
  %v146 = vld [vmem:[%s3 + $0x10] sm:$0xff]
  %v147 = vld [vmem:[%s3 + $0x18] sm:$0xff]
  %v148 = vld [vmem:[%s3 + $0x20] sm:$0xff]
  %v149 = vld [vmem:[%s3 + $0x28] sm:$0xff]
  %v150 = vld [vmem:[%s3 + $0x30] sm:$0xff]
  %v151 = vld [vmem:[%s3 + $0x38] sm:$0xff]
  %v152 = vld [vmem:[%s3 + $0x40] sm:$0xff]
  %v153 = vld [vmem:[%s3 + $0x48] sm:$0xff]
  %v154 = vld [vmem:[%s3 + $0x50] sm:$0xff]
  %v155 = vld [vmem:[%s3 + $0x58] sm:$0xff]
  %v156 = vld [vmem:[%s3 + $0x60] sm:$0xff]
  %v157 = vld [vmem:[%s3 + $0x68] sm:$0xff]
  %v158 = vld [vmem:[%s3 + $0x70] sm:$0xff]
  %v159 = vld [vmem:[%s3 + $0x78] sm:$0xff]
  %v160 = vld [vmem:[%s3 + $0x80] sm:$0xff]
  %v161 = vld [vmem:[%s3 + $0x88] sm:$0xff]
  %v162 = vld [vmem:[%s3 + $0x90] sm:$0xff]
  %v163 = vld [vmem:[%s3 + $0x98] sm:$0xff]
  %v164 = vld [vmem:[%s3 + $0xa0] sm:$0xff]
  %v165 = vld [vmem:[%s3 + $0xa8] sm:$0xff]
  %v166 = vld [vmem:[%s3 + $0xb0] sm:$0xff]
  %v167 = vld [vmem:[%s3 + $0xb8] sm:$0xff]
  %v168 = vld [vmem:[%s3 + $0xc0] sm:$0xff]
  %v169 = vld [vmem:[%s3 + $0xc8] sm:$0xff]
  %v170 = vld [vmem:[%s3 + $0xd0] sm:$0xff]
  %v171 = vld [vmem:[%s3 + $0xd8] sm:$0xff]
  %v172 = vld [vmem:[%s3 + $0xe0] sm:$0xff]
  %v173 = vld [vmem:[%s3 + $0xe8] sm:$0xff]
  %v174 = vld [vmem:[%s3 + $0xf0] sm:$0xff]
  %v175 = vld [vmem:[%s3 + $0xf8] sm:$0xff]
  %v176 = vld [vmem:[%s3 + $0x100] sm:$0xff]
  %v177 = vld [vmem:[%s3 + $0x108] sm:$0xff]
  %v178 = vld [vmem:[%s3 + $0x110] sm:$0xff]
  %v179 = vld [vmem:[%s3 + $0x118] sm:$0xff]
  %v180 = vld [vmem:[%s3 + $0x120] sm:$0xff]
  %v181 = vld [vmem:[%s3 + $0x128] sm:$0xff]
  %v182 = vld [vmem:[%s3 + $0x130] sm:$0xff]
  %v183 = vld [vmem:[%s3 + $0x138] sm:$0xff]
  %v184 = vld [vmem:[%s3 + $0x140] sm:$0xff]
  %v185 = vld [vmem:[%s3 + $0x148] sm:$0xff]
  %v186 = vld [vmem:[%s3 + $0x150] sm:$0xff]
  %v187 = vld [vmem:[%s3 + $0x158] sm:$0xff]
  %v188 = vld [vmem:[%s3 + $0x160] sm:$0xff]
  %v189 = vld [vmem:[%s3 + $0x168] sm:$0xff]
  %v190 = vld [vmem:[%s3 + $0x170] sm:$0xff]
  %v191 = vld [vmem:[%s3 + $0x178] sm:$0xff]
  %v192 = vld [vmem:[%s3 + $0x180] sm:$0xff]
  %v193 = vld [vmem:[%s3 + $0x188] sm:$0xff]
  %v194 = vld [vmem:[%s3 + $0x190] sm:$0xff]
  %v195 = vld [vmem:[%s3 + $0x198] sm:$0xff]
  %v196 = vld [vmem:[%s3 + $0x1a0] sm:$0xff]
  %v197 = vld [vmem:[%s3 + $0x1a8] sm:$0xff]
  %v198 = vld [vmem:[%s3 + $0x1b0] sm:$0xff]
  %v199 = vld [vmem:[%s3 + $0x1b8] sm:$0xff]
  %v200 = vld [vmem:[%s3 + $0x1c0] sm:$0xff]
  %v201 = vld [vmem:[%s3 + $0x1c8] sm:$0xff]
  %v202 = vld [vmem:[%s3 + $0x1d0] sm:$0xff]
  %v203 = vld [vmem:[%s3 + $0x1d8] sm:$0xff]
  %v204 = vld [vmem:[%s3 + $0x1e0] sm:$0xff]
  %v205 = vld [vmem:[%s3 + $0x1e8] sm:$0xff]
  %v206 = vld [vmem:[%s3 + $0x1f0] sm:$0xff]
  %v207 = vld [vmem:[%s3 + $0x1f8] sm:$0xff]
  %v208 = vld [vmem:[%s3 + $0x200] sm:$0xff]
  %v209 = vld [vmem:[%s3 + $0x208] sm:$0xff]
  %v210 = vld [vmem:[%s3 + $0x210] sm:$0xff]
  %v211 = vld [vmem:[%s3 + $0x218] sm:$0xff]
  %v212 = vld [vmem:[%s3 + $0x220] sm:$0xff]
  %v213 = vld [vmem:[%s3 + $0x228] sm:$0xff]
  %v214 = vld [vmem:[%s3 + $0x230] sm:$0xff]
  %v215 = vld [vmem:[%s3 + $0x238] sm:$0xff]
  %v216 = vld [vmem:[%s3 + $0x240] sm:$0xff]
  %v217 = vld [vmem:[%s3 + $0x248] sm:$0xff]
  %v218 = vld [vmem:[%s3 + $0x250] sm:$0xff]
  %v219 = vld [vmem:[%s3 + $0x258] sm:$0xff]
  %v220 = vld [vmem:[%s3 + $0x260] sm:$0xff]
  %v221 = vld [vmem:[%s3 + $0x268] sm:$0xff]
  %v222 = vld [vmem:[%s3 + $0x270] sm:$0xff]
  %v223 = vld [vmem:[%s3 + $0x278] sm:$0xff]
  %v224 = vld [vmem:[%s3 + $0x280] sm:$0xff]
  %v225 = vld [vmem:[%s3 + $0x288] sm:$0xff]
  %v226 = vld [vmem:[%s3 + $0x290] sm:$0xff]
  %v227 = vld [vmem:[%s3 + $0x298] sm:$0xff]
  %v228 = vld [vmem:[%s3 + $0x2a0] sm:$0xff]
  %v229 = vld [vmem:[%s3 + $0x2a8] sm:$0xff]
  %v230 = vld [vmem:[%s3 + $0x2b0] sm:$0xff]
  %v231 = vld [vmem:[%s3 + $0x2b8] sm:$0xff]
  %v232 = vld [vmem:[%s3 + $0x2c0] sm:$0xff]
  %v233 = vld [vmem:[%s3 + $0x2c8] sm:$0xff]
  %v234 = vld [vmem:[%s3 + $0x2d0] sm:$0xff]
  %v235 = vld [vmem:[%s3 + $0x2d8] sm:$0xff]
  %v236 = vld [vmem:[%s3 + $0x2e0] sm:$0xff]
  %v237 = vld [vmem:[%s3 + $0x2e8] sm:$0xff]
  %v238 = vld [vmem:[%s3 + $0x2f0] sm:$0xff]
  %v239 = vld [vmem:[%s3 + $0x2f8] sm:$0xff]
  %v240 = vld [vmem:[%s3 + $0x300] sm:$0xff]
  %v241 = vld [vmem:[%s3 + $0x308] sm:$0xff]
  %v242 = vld [vmem:[%s3 + $0x310] sm:$0xff]
  %v243 = vld [vmem:[%s3 + $0x318] sm:$0xff]
  %v244 = vld [vmem:[%s3 + $0x320] sm:$0xff]
  %v245 = vld [vmem:[%s3 + $0x328] sm:$0xff]
  %v246 = vld [vmem:[%s3 + $0x330] sm:$0xff]
  %v247 = vld [vmem:[%s3 + $0x338] sm:$0xff]
  %v248 = vld [vmem:[%s3 + $0x340] sm:$0xff]
  %v249 = vld [vmem:[%s3 + $0x348] sm:$0xff]
  %v250 = vld [vmem:[%s3 + $0x350] sm:$0xff]
  %v251 = vld [vmem:[%s3 + $0x358] sm:$0xff]
  %v252 = vld [vmem:[%s3 + $0x360] sm:$0xff]
  %v253 = vld [vmem:[%s3 + $0x368] sm:$0xff]
  %v254 = vld [vmem:[%s3 + $0x370] sm:$0xff]
  %v255 = vld [vmem:[%s3 + $0x378] sm:$0xff]
  %v256 = vld [vmem:[%s3 + $0x380] sm:$0xff]
  %v257 = vld [vmem:[%s3 + $0x388] sm:$0xff]
  %v258 = vld [vmem:[%s3 + $0x390] sm:$0xff]
  %v259 = vld [vmem:[%s3 + $0x398] sm:$0xff]
  %v260 = vld [vmem:[%s3 + $0x3a0] sm:$0xff]
  %v261 = vld [vmem:[%s3 + $0x3a8] sm:$0xff]
  %v262 = vld [vmem:[%s3 + $0x3b0] sm:$0xff]
  %v263 = vld [vmem:[%s3 + $0x3b8] sm:$0xff]
  %v264 = vld [vmem:[%s3 + $0x3c0] sm:$0xff]
  %v265 = vld [vmem:[%s3 + $0x3c8] sm:$0xff]
  %v266 = vld [vmem:[%s3 + $0x3d0] sm:$0xff]
  %v267 = vld [vmem:[%s3 + $0x3d8] sm:$0xff]
  %v268 = vld [vmem:[%s3 + $0x3e0] sm:$0xff]
  %v269 = vld [vmem:[%s3 + $0x3e8] sm:$0xff]
  %v270 = vld [vmem:[%s3 + $0x3f0] sm:$0xff]
  %v271 = vld [vmem:[%s3 + $0x3f8] sm:$0xff]
  %v272 = vld [vmem:[%s4] sm:$0xf]
  %v274 = vlaneseq
  %v275 = vshrl.u32 %v274, 7
  %v276 = vsub.s32 0, %v275
  %v277 = vrot.slane %v272, %v276
  %v278 = vlaneseq
  %v279 = vshrl.u32 %v278, 7
  %v280 = vsub.s32 1, %v279
  %v281 = vrot.slane %v272, %v280
  %v282 = vlaneseq
  %v283 = vshrl.u32 %v282, 7
  %v284 = vsub.s32 2, %v283
  %v285 = vrot.slane %v272, %v284
  %v286 = vlaneseq
  %v287 = vshrl.u32 %v286, 7
  %v288 = vsub.s32 3, %v287
  %v289 = vrot.slane %v272, %v288
  %294 = vmatprep.subr.mxu0 %v145
  %295 = vmatpush1.msra.mxu0 %v144
  %296 = vmatprep.subr.mxu0 %v149
  %297 = vmatpush1.msra.mxu0 %v148
  %298 = vmatprep.subr.mxu0 %v153
  %299 = vmatpush1.msra.mxu0 %v152
  %300 = vmatprep.subr.mxu0 %v157
  %301 = vmatpush1.msra.mxu0 %v156
  %302 = vmatprep.subr.mxu0 %v161
  %303 = vmatpush1.msra.mxu0 %v160
  %304 = vmatprep.subr.mxu0 %v165
  %305 = vmatpush1.msra.mxu0 %v164
  %306 = vmatprep.subr.mxu0 %v169
  %307 = vmatpush1.msra.mxu0 %v168
  %308 = vmatprep.subr.mxu0 %v173
  %309 = vmatpush1.msra.mxu0 %v172
  %310 = vmatprep.subr.mxu0 %v177
  %311 = vmatpush1.msra.mxu0 %v176
  %312 = vmatprep.subr.mxu0 %v181
  %313 = vmatpush1.msra.mxu0 %v180
  %314 = vmatprep.subr.mxu0 %v185
  %315 = vmatpush1.msra.mxu0 %v184
  %316 = vmatprep.subr.mxu0 %v189
  %317 = vmatpush1.msra.mxu0 %v188
  %318 = vmatprep.subr.mxu0 %v193
  %319 = vmatpush1.msra.mxu0 %v192
  %320 = vmatprep.subr.mxu0 %v197
  %321 = vmatpush1.msra.mxu0 %v196
  %322 = vmatprep.subr.mxu0 %v201
  %323 = vmatpush1.msra.mxu0 %v200
  %324 = vmatprep.subr.mxu0 %v205
  %325 = vmatpush1.msra.mxu0 %v204
  %326 = vmatprep.subr.mxu0 %v209
  %327 = vmatpush1.msra.mxu0 %v208
  %328 = vmatprep.subr.mxu0 %v213
  %329 = vmatpush1.msra.mxu0 %v212
  %330 = vmatprep.subr.mxu0 %v217
  %331 = vmatpush1.msra.mxu0 %v216
  %332 = vmatprep.subr.mxu0 %v221
  %333 = vmatpush1.msra.mxu0 %v220
  %334 = vmatprep.subr.mxu0 %v225
  %335 = vmatpush1.msra.mxu0 %v224
  %336 = vmatprep.subr.mxu0 %v229
  %337 = vmatpush1.msra.mxu0 %v228
  %338 = vmatprep.subr.mxu0 %v233
  %339 = vmatpush1.msra.mxu0 %v232
  %340 = vmatprep.subr.mxu0 %v237
  %341 = vmatpush1.msra.mxu0 %v236
  %342 = vmatprep.subr.mxu0 %v241
  %343 = vmatpush1.msra.mxu0 %v240
  %344 = vmatprep.subr.mxu0 %v245
  %345 = vmatpush1.msra.mxu0 %v244
  %346 = vmatprep.subr.mxu0 %v249
  %347 = vmatpush1.msra.mxu0 %v248
  %348 = vmatprep.subr.mxu0 %v253
  %349 = vmatpush1.msra.mxu0 %v252
  %350 = vmatprep.subr.mxu0 %v257
  %351 = vmatpush1.msra.mxu0 %v256
  %352 = vmatprep.subr.mxu0 %v261
  %353 = vmatpush1.msra.mxu0 %v260
  %354 = vmatprep.subr.mxu0 %v265
  %355 = vmatpush1.msra.mxu0 %v264
  %356 = vmatprep.subr.mxu0 %v269
  %357 = vmatpush1.msra.mxu0 %v268
  %358 = vmatprep.mubr.f32.mxu0 %v143
  %359 = vmatmul.mubr.f32.gmra.mrb[0].mxu0 %v142
  %v360 = vpop.f32.mrb[0].mxu0
  %v361 = vadd.f32 %v277, %v360
  %v362 = vpop.f32.mrb[0].mxu0
  %v363 = vadd.f32 %v281, %v362
  %364 = vdwg.mxu0
  %365 = vmatprep.subr.mxu0 %v147
  %366 = vmatpush1.msra.mxu0 %v146
  %367 = vmatprep.subr.mxu0 %v151
  %368 = vmatpush1.msra.mxu0 %v150
  %369 = vmatprep.subr.mxu0 %v155
  %370 = vmatpush1.msra.mxu0 %v154
  %371 = vmatprep.subr.mxu0 %v159
  %372 = vmatpush1.msra.mxu0 %v158
  %373 = vmatprep.subr.mxu0 %v163
  %374 = vmatpush1.msra.mxu0 %v162
  %375 = vmatprep.subr.mxu0 %v167
  %376 = vmatpush1.msra.mxu0 %v166
  %377 = vmatprep.subr.mxu0 %v171
  %378 = vmatpush1.msra.mxu0 %v170
  %379 = vmatprep.subr.mxu0 %v175
  %380 = vmatpush1.msra.mxu0 %v174
  %381 = vmatprep.subr.mxu0 %v179
  %382 = vmatpush1.msra.mxu0 %v178
  %383 = vmatprep.subr.mxu0 %v183
  %384 = vmatpush1.msra.mxu0 %v182
  %385 = vmatprep.subr.mxu0 %v187
  %386 = vmatpush1.msra.mxu0 %v186
  %387 = vmatprep.subr.mxu0 %v191
  %388 = vmatpush1.msra.mxu0 %v190
  %389 = vmatprep.subr.mxu0 %v195
  %390 = vmatpush1.msra.mxu0 %v194
  %391 = vmatprep.subr.mxu0 %v199
  %392 = vmatpush1.msra.mxu0 %v198
  %393 = vmatprep.subr.mxu0 %v203
  %394 = vmatpush1.msra.mxu0 %v202
  %395 = vmatprep.subr.mxu0 %v207
  %396 = vmatpush1.msra.mxu0 %v206
  %397 = vmatprep.subr.mxu0 %v211
  %398 = vmatpush1.msra.mxu0 %v210
  %399 = vmatprep.subr.mxu0 %v215
  %400 = vmatpush1.msra.mxu0 %v214
  %401 = vmatprep.subr.mxu0 %v219
  %402 = vmatpush1.msra.mxu0 %v218
  %403 = vmatprep.subr.mxu0 %v223
  %404 = vmatpush1.msra.mxu0 %v222
  %405 = vmatprep.subr.mxu0 %v227
  %406 = vmatpush1.msra.mxu0 %v226
  %407 = vmatprep.subr.mxu0 %v231
  %408 = vmatpush1.msra.mxu0 %v230
  %409 = vmatprep.subr.mxu0 %v235
  %410 = vmatpush1.msra.mxu0 %v234
  %411 = vmatprep.subr.mxu0 %v239
  %412 = vmatpush1.msra.mxu0 %v238
  %413 = vmatprep.subr.mxu0 %v243
  %414 = vmatpush1.msra.mxu0 %v242
  %415 = vmatprep.subr.mxu0 %v247
  %416 = vmatpush1.msra.mxu0 %v246
  %417 = vmatprep.subr.mxu0 %v251
  %418 = vmatpush1.msra.mxu0 %v250
  %419 = vmatprep.subr.mxu0 %v255
  %420 = vmatpush1.msra.mxu0 %v254
  %421 = vmatprep.subr.mxu0 %v259
  %422 = vmatpush1.msra.mxu0 %v258
  %423 = vmatprep.subr.mxu0 %v263
  %424 = vmatpush1.msra.mxu0 %v262
  %425 = vmatprep.subr.mxu0 %v267
  %426 = vmatpush1.msra.mxu0 %v266
  %427 = vmatprep.subr.mxu0 %v271
  %428 = vmatpush1.msra.mxu0 %v270
  %429 = vmatprep.mubr.f32.mxu0 %v143
  %430 = vmatmul.mubr.f32.gmra.mrb[0].mxu0 %v142
  %v431 = vpop.f32.mrb[0].mxu0
  %v432 = vadd.f32 %v285, %v431
  %v433 = vpop.f32.mrb[0].mxu0
  %v434 = vadd.f32 %v289, %v433
  %435 = vdwg.mxu0
  %v436 = vmax.f32 %v361, 0.0
  %v437 = vmax.f32 %v363, 0.0
  %v438 = vmax.f32 %v432, 0.0
  %v439 = vmax.f32 %v434, 0.0
  %v440 = vld [vmem:[%s5] sm:$0xff]
  %v441 = vld [vmem:[%s5 + $0x8] sm:$0xff]
  %v442 = vld [vmem:[%s5 + $0x10] sm:$0xff]
  %v443 = vld [vmem:[%s5 + $0x18] sm:$0xff]
  %v444 = vld [vmem:[%s5 + $0x20] sm:$0xff]
  %v445 = vld [vmem:[%s5 + $0x28] sm:$0xff]
  %v446 = vld [vmem:[%s5 + $0x30] sm:$0xff]
  %v447 = vld [vmem:[%s5 + $0x38] sm:$0xff]
  %v448 = vld [vmem:[%s5 + $0x40] sm:$0xff]
  %v449 = vld [vmem:[%s5 + $0x48] sm:$0xff]
  %v450 = vld [vmem:[%s5 + $0x50] sm:$0xff]
  %v451 = vld [vmem:[%s5 + $0x58] sm:$0xff]
  %v452 = vld [vmem:[%s5 + $0x60] sm:$0xff]
  %v453 = vld [vmem:[%s5 + $0x68] sm:$0xff]
  %v454 = vld [vmem:[%s5 + $0x70] sm:$0xff]
  %v455 = vld [vmem:[%s5 + $0x78] sm:$0xff]
  %v456 = vld [vmem:[%s5 + $0x80] sm:$0xff]
  %v457 = vld [vmem:[%s5 + $0x88] sm:$0xff]
  %v458 = vld [vmem:[%s5 + $0x90] sm:$0xff]
  %v459 = vld [vmem:[%s5 + $0x98] sm:$0xff]
  %v460 = vld [vmem:[%s5 + $0xa0] sm:$0xff]
  %v461 = vld [vmem:[%s5 + $0xa8] sm:$0xff]
  %v462 = vld [vmem:[%s5 + $0xb0] sm:$0xff]
  %v463 = vld [vmem:[%s5 + $0xb8] sm:$0xff]
  %v464 = vld [vmem:[%s5 + $0xc0] sm:$0xff]
  %v465 = vld [vmem:[%s5 + $0xc8] sm:$0xff]
  %v466 = vld [vmem:[%s5 + $0xd0] sm:$0xff]
  %v467 = vld [vmem:[%s5 + $0xd8] sm:$0xff]
  %v468 = vld [vmem:[%s5 + $0xe0] sm:$0xff]
  %v469 = vld [vmem:[%s5 + $0xe8] sm:$0xff]
  %v470 = vld [vmem:[%s5 + $0xf0] sm:$0xff]
  %v471 = vld [vmem:[%s5 + $0xf8] sm:$0xff]
  %v472 = vld [vmem:[%s5 + $0x100] sm:$0xff]
  %v473 = vld [vmem:[%s5 + $0x108] sm:$0xff]
  %v474 = vld [vmem:[%s5 + $0x110] sm:$0xff]
  %v475 = vld [vmem:[%s5 + $0x118] sm:$0xff]
  %v476 = vld [vmem:[%s5 + $0x120] sm:$0xff]
  %v477 = vld [vmem:[%s5 + $0x128] sm:$0xff]
  %v478 = vld [vmem:[%s5 + $0x130] sm:$0xff]
  %v479 = vld [vmem:[%s5 + $0x138] sm:$0xff]
  %v480 = vld [vmem:[%s5 + $0x140] sm:$0xff]
  %v481 = vld [vmem:[%s5 + $0x148] sm:$0xff]
  %v482 = vld [vmem:[%s5 + $0x150] sm:$0xff]
  %v483 = vld [vmem:[%s5 + $0x158] sm:$0xff]
  %v484 = vld [vmem:[%s5 + $0x160] sm:$0xff]
  %v485 = vld [vmem:[%s5 + $0x168] sm:$0xff]
  %v486 = vld [vmem:[%s5 + $0x170] sm:$0xff]
  %v487 = vld [vmem:[%s5 + $0x178] sm:$0xff]
  %v488 = vld [vmem:[%s5 + $0x180] sm:$0xff]
  %v489 = vld [vmem:[%s5 + $0x188] sm:$0xff]
  %v490 = vld [vmem:[%s5 + $0x190] sm:$0xff]
  %v491 = vld [vmem:[%s5 + $0x198] sm:$0xff]
  %v492 = vld [vmem:[%s5 + $0x1a0] sm:$0xff]
  %v493 = vld [vmem:[%s5 + $0x1a8] sm:$0xff]
  %v494 = vld [vmem:[%s5 + $0x1b0] sm:$0xff]
  %v495 = vld [vmem:[%s5 + $0x1b8] sm:$0xff]
  %v496 = vld [vmem:[%s5 + $0x1c0] sm:$0xff]
  %v497 = vld [vmem:[%s5 + $0x1c8] sm:$0xff]
  %v498 = vld [vmem:[%s5 + $0x1d0] sm:$0xff]
  %v499 = vld [vmem:[%s5 + $0x1d8] sm:$0xff]
  %v500 = vld [vmem:[%s5 + $0x1e0] sm:$0xff]
  %v501 = vld [vmem:[%s5 + $0x1e8] sm:$0xff]
  %v502 = vld [vmem:[%s5 + $0x1f0] sm:$0xff]
  %v503 = vld [vmem:[%s5 + $0x1f8] sm:$0xff]
  %v504 = vld [vmem:[%s6] sm:$0x1]
  %505 = vmatprep.subr.mxu0 0.0
  %506 = vmatpush1.msra.mxu0 %v440
  %507 = vmatprep.subr.mxu0 0.0
  %508 = vmatpush1.msra.mxu0 %v441
  %509 = vmatprep.subr.mxu0 0.0
  %510 = vmatpush1.msra.mxu0 %v442
  %511 = vmatprep.subr.mxu0 0.0
  %512 = vmatpush1.msra.mxu0 %v443
  %513 = vmatprep.subr.mxu0 0.0
  %514 = vmatpush1.msra.mxu0 %v444
  %515 = vmatprep.subr.mxu0 0.0
  %516 = vmatpush1.msra.mxu0 %v445
  %517 = vmatprep.subr.mxu0 0.0
  %518 = vmatpush1.msra.mxu0 %v446
  %519 = vmatprep.subr.mxu0 0.0
  %520 = vmatpush1.msra.mxu0 %v447
  %521 = vmatprep.subr.mxu0 0.0
  %522 = vmatpush1.msra.mxu0 %v448
  %523 = vmatprep.subr.mxu0 0.0
  %524 = vmatpush1.msra.mxu0 %v449
  %525 = vmatprep.subr.mxu0 0.0
  %526 = vmatpush1.msra.mxu0 %v450
  %527 = vmatprep.subr.mxu0 0.0
  %528 = vmatpush1.msra.mxu0 %v451
  %529 = vmatprep.subr.mxu0 0.0
  %530 = vmatpush1.msra.mxu0 %v452
  %531 = vmatprep.subr.mxu0 0.0
  %532 = vmatpush1.msra.mxu0 %v453
  %533 = vmatprep.subr.mxu0 0.0
  %534 = vmatpush1.msra.mxu0 %v454
  %535 = vmatprep.subr.mxu0 0.0
  %536 = vmatpush1.msra.mxu0 %v455
  %537 = vmatprep.subr.mxu0 0.0
  %538 = vmatpush1.msra.mxu0 %v456
  %539 = vmatprep.subr.mxu0 0.0
  %540 = vmatpush1.msra.mxu0 %v457
  %541 = vmatprep.subr.mxu0 0.0
  %542 = vmatpush1.msra.mxu0 %v458
  %543 = vmatprep.subr.mxu0 0.0
  %544 = vmatpush1.msra.mxu0 %v459
  %545 = vmatprep.subr.mxu0 0.0
  %546 = vmatpush1.msra.mxu0 %v460
  %547 = vmatprep.subr.mxu0 0.0
  %548 = vmatpush1.msra.mxu0 %v461
  %549 = vmatprep.subr.mxu0 0.0
  %550 = vmatpush1.msra.mxu0 %v462
  %551 = vmatprep.subr.mxu0 0.0
  %552 = vmatpush1.msra.mxu0 %v463
  %553 = vmatprep.subr.mxu0 0.0
  %554 = vmatpush1.msra.mxu0 %v464
  %555 = vmatprep.subr.mxu0 0.0
  %556 = vmatpush1.msra.mxu0 %v465
  %557 = vmatprep.subr.mxu0 0.0
  %558 = vmatpush1.msra.mxu0 %v466
  %559 = vmatprep.subr.mxu0 0.0
  %560 = vmatpush1.msra.mxu0 %v467
  %561 = vmatprep.subr.mxu0 0.0
  %562 = vmatpush1.msra.mxu0 %v468
  %563 = vmatprep.subr.mxu0 0.0
  %564 = vmatpush1.msra.mxu0 %v469
  %565 = vmatprep.subr.mxu0 0.0
  %566 = vmatpush1.msra.mxu0 %v470
  %567 = vmatprep.subr.mxu0 0.0
  %568 = vmatpush1.msra.mxu0 %v471
  %569 = vmatprep.mubr.f32.mxu0 %v437
  %570 = vmatmul.mubr.f32.gmra.mrb[0].mxu0 %v436
  %v571 = vpop.f32.mrb[0].mxu0
  %v572 = vadd.f32 %v504, %v571
  %v573 = vpop.f32.mrb[0].mxu0
  %574 = vdwg.mxu0
  %575 = vmatprep.subr.mxu0 0.0
  %576 = vmatpush1.msra.mxu0 %v472
  %577 = vmatprep.subr.mxu0 0.0
  %578 = vmatpush1.msra.mxu0 %v473
  %579 = vmatprep.subr.mxu0 0.0
  %580 = vmatpush1.msra.mxu0 %v474
  %581 = vmatprep.subr.mxu0 0.0
  %582 = vmatpush1.msra.mxu0 %v475
  %583 = vmatprep.subr.mxu0 0.0
  %584 = vmatpush1.msra.mxu0 %v476
  %585 = vmatprep.subr.mxu0 0.0
  %586 = vmatpush1.msra.mxu0 %v477
  %587 = vmatprep.subr.mxu0 0.0
  %588 = vmatpush1.msra.mxu0 %v478
  %589 = vmatprep.subr.mxu0 0.0
  %590 = vmatpush1.msra.mxu0 %v479
  %591 = vmatprep.subr.mxu0 0.0
  %592 = vmatpush1.msra.mxu0 %v480
  %593 = vmatprep.subr.mxu0 0.0
  %594 = vmatpush1.msra.mxu0 %v481
  %595 = vmatprep.subr.mxu0 0.0
  %596 = vmatpush1.msra.mxu0 %v482
  %597 = vmatprep.subr.mxu0 0.0
  %598 = vmatpush1.msra.mxu0 %v483
  %599 = vmatprep.subr.mxu0 0.0
  %600 = vmatpush1.msra.mxu0 %v484
  %601 = vmatprep.subr.mxu0 0.0
  %602 = vmatpush1.msra.mxu0 %v485
  %603 = vmatprep.subr.mxu0 0.0
  %604 = vmatpush1.msra.mxu0 %v486
  %605 = vmatprep.subr.mxu0 0.0
  %606 = vmatpush1.msra.mxu0 %v487
  %607 = vmatprep.subr.mxu0 0.0
  %608 = vmatpush1.msra.mxu0 %v488
  %609 = vmatprep.subr.mxu0 0.0
  %610 = vmatpush1.msra.mxu0 %v489
  %611 = vmatprep.subr.mxu0 0.0
  %612 = vmatpush1.msra.mxu0 %v490
  %613 = vmatprep.subr.mxu0 0.0
  %614 = vmatpush1.msra.mxu0 %v491
  %615 = vmatprep.subr.mxu0 0.0
  %616 = vmatpush1.msra.mxu0 %v492
  %617 = vmatprep.subr.mxu0 0.0
  %618 = vmatpush1.msra.mxu0 %v493
  %619 = vmatprep.subr.mxu0 0.0
  %620 = vmatpush1.msra.mxu0 %v494
  %621 = vmatprep.subr.mxu0 0.0
  %622 = vmatpush1.msra.mxu0 %v495
  %623 = vmatprep.subr.mxu0 0.0
  %624 = vmatpush1.msra.mxu0 %v496
  %625 = vmatprep.subr.mxu0 0.0
  %626 = vmatpush1.msra.mxu0 %v497
  %627 = vmatprep.subr.mxu0 0.0
  %628 = vmatpush1.msra.mxu0 %v498
  %629 = vmatprep.subr.mxu0 0.0
  %630 = vmatpush1.msra.mxu0 %v499
  %631 = vmatprep.subr.mxu0 0.0
  %632 = vmatpush1.msra.mxu0 %v500
  %633 = vmatprep.subr.mxu0 0.0
  %634 = vmatpush1.msra.mxu0 %v501
  %635 = vmatprep.subr.mxu0 0.0
  %636 = vmatpush1.msra.mxu0 %v502
  %637 = vmatprep.subr.mxu0 0.0
  %638 = vmatpush1.msra.mxu0 %v503
  %639 = vmatprep.mubr.f32.mxu0 %v439
  %640 = vmatmul.mubr.f32.gmra.mrb[0].mxu0 %v438
  %v641 = vpop.f32.mrb[0].mxu0
  %v642 = vadd.f32 %v572, %v641
  %v643 = vpop.f32.mrb[0].mxu0
  %644 = vdwg.mxu0
  %vm645 = vcmask 516096
  %646 = vst.msk [vmem:[%s7] sm:$0x1] %vm645, %v642
  // Predicated region
  $region30: #{decoder_forward.1} parent=0 // pred_check
    _
  $region31: #{decoder_forward.1} parent=0 // pred_check_branch
    %648 = sbr.rel (0) target = $region33
  $region32: #{decoder_forward.1} parent=0 // pred_region
    _
  $region33: #{decoder_forward.1} parent=0 // pred_fallthru
    _
  // Predicated region
  $region34: #{decoder_forward.1} parent=0 // pred_check
    _
  $region35: #{decoder_forward.1} parent=0 // pred_check_branch
    %650 = sbr.rel (0) target = $region37
  $region36: #{decoder_forward.1} parent=0 // pred_region
    _
  $region37: #{decoder_forward.1} parent=0 // pred_fallthru
    _

</llo_original>
